<compile_context>
chip_gen: v7x
topology: tpu7x:2x2x1
jax: 0.10.0
libtpu: 0.0.40
codegen_flags: <defaults>
</compile_context>

<pallas_src>
import jax
import jax.numpy as jnp
from jax.experimental import pallas as pl
from jax.experimental.pallas import tpu as pltpu


# ----------------------------------------------------------------------------
# Kernel: whole ensemble, one invocation per batch tile.
# ----------------------------------------------------------------------------
def _fused_ensemble_kernel(x_ref, w0_ref, b0_ref, w1_ref, b1_ref,
                           w2_ref, b2_ref, red_ref, out_ref):
    two_o = out_ref.shape[1]          # 2 * output_dim (static)
    o = two_o // 2
    mo = w2_ref.shape[1] // 2         # M * output_dim (static)

    x = x_ref[...]                                                    # [TB, D_in]

    # Layer 0: all M models fused along the lane axis -> [TB, M*H1]
    h = jnp.dot(x, w0_ref[...], preferred_element_type=jnp.float32) + b0_ref[...]
    h = jnp.maximum(h, 0.0)

    # Layer 1: one block-diagonal matmul covering all models -> [TB, M*H2]
    h = jnp.dot(h, w1_ref[...], preferred_element_type=jnp.float32) + b1_ref[...]
    h = jnp.maximum(h, 0.0)

    # Fused heads (mu | var raw), one matmul -> [TB, 2*M*O]
    y = jnp.dot(h, w2_ref[...], preferred_element_type=jnp.float32) + b2_ref[...]
    ymu = y[:, :mo]                                                   # [TB, M*O]
    var = jax.nn.softplus(y[:, mo:]) + 1e-6                           # [TB, M*O]
    sq = var + ymu * ymu                                              # var_m + mu_m^2

    # Fused mixture reduction: one dot produces [E[mu] | E[mu^2+var]] -> [TB, 2*O]
    z = jnp.concatenate([ymu, sq], axis=1)                            # [TB, 2*M*O]
    red = jnp.dot(z, red_ref[...], preferred_element_type=jnp.float32)

    mu_mean = red[:, :o]
    var_mix = red[:, o:] - mu_mean * mu_mean
    # Single full-ref store of the combined [mu | var] slab.
    out_ref[...] = jnp.concatenate([mu_mean, var_mix], axis=1)


# ----------------------------------------------------------------------------
# One-time parameter packing (hoisted out of the forward hot path).
# ----------------------------------------------------------------------------
def pack_params(params):
    """Pre-transpose / fuse the per-model PyTorch-layout weights for the kernel.

    Call ONCE (e.g. at model init) and reuse the returned tuple for every
    forward; the forward itself is then a single pallas_call.
    """
    w0, b0 = params["w0"], params["b0"]    # [M, H1, D_in], [M, 1, H1]
    w1, b1 = params["w1"], params["b1"]    # [M, H2, H1],  [M, 1, H2]
    w2, b2 = params["w2"], params["b2"]    # [M, 2*O, H2], [M, 1, 2*O]
    M, H1, D_in = w0.shape
    H2 = w1.shape[1]
    O = w2.shape[1] // 2

    eye_m = jnp.eye(M, dtype=w0.dtype)

    # Layer 0: ensemble fused along lanes -> x @ [D_in, M*H1]
    w0p = jnp.transpose(w0, (2, 0, 1)).reshape(D_in, M * H1)
    b0p = b0.reshape(1, M * H1)

    # Layer 1: block-diagonal [M*H1, M*H2]
    w1t = jnp.transpose(w1, (0, 2, 1))                                   # [M, H1, H2]
    w1bd = jnp.einsum("mn,mhk->mhnk", eye_m, w1t).reshape(M * H1, M * H2)
    b1p = b1.reshape(1, M * H2)

    # Heads: split mu / var, block-diagonalize, and FUSE along lanes
    # -> [M*H2, 2*M*O] so the kernel does one head matmul.
    w2t = jnp.transpose(w2, (0, 2, 1))                                   # [M, H2, 2*O]
    w2mu_bd = jnp.einsum("mn,mhk->mhnk", eye_m, w2t[:, :, :O]).reshape(M * H2, M * O)
    w2var_bd = jnp.einsum("mn,mhk->mhnk", eye_m, w2t[:, :, O:]).reshape(M * H2, M * O)
    w2bd = jnp.concatenate([w2mu_bd, w2var_bd], axis=1)                  # [M*H2, 2*M*O]
    b2p = jnp.concatenate(
        [b2[:, 0, :O].reshape(1, M * O), b2[:, 0, O:].reshape(1, M * O)], axis=1)

    # Fused mean-over-models reducer: [2*M*O, 2*O], block-diag of two 1/M reducers
    # so one dot yields [E[mu] | E[mu^2+var]] contiguously.
    rmean = jnp.tile(jnp.eye(O, dtype=w0.dtype), (M, 1)) / M             # [M*O, O]
    red = jnp.kron(jnp.eye(2, dtype=w0.dtype), rmean)                    # [2*M*O, 2*O]

    packed = (w0p, b0p, w1bd, b1p, w2bd, b2p, red)

    # Guard: block-diag packing scales O(M^2*H^2) and the pipeline keeps the
    # weights resident; keep the packed footprint well inside per-TC VMEM
    # (v7x: 64 MiB physical, 32 MiB default scoped limit).
    packed_bytes = 4 * sum(int(a.size) for a in packed)
    assert packed_bytes < 16 * 1024 * 1024, (
        "packed ensemble weights too large for fused block-diagonal kernel")
    # TODO(synk): for large M*H, fall back to a per-model grid / batched dot_general
    # formulation instead of block-diagonal packing.

    return packed


def _choose_batch_tile(B):
    """Batch tile: big tiles for low per-step overhead, but nb >= 2 for large B
    so the 'parallel' grid axis can shard across v7x's two TensorCores."""
    if B <= 256:
        return B
    for tb in (2048, 1024, 512, 256, 128, 64, 32, 16, 8):
        if B % tb == 0 and B // tb >= 2:
            return tb
    return B  # odd batch size: single full-extent tile


# ----------------------------------------------------------------------------
# Forward: a single pallas_call on pre-packed params.
# ----------------------------------------------------------------------------
def gaussian_mixture_mlp_forward(x, packed, output_dim):
    """x: [B, D_in] f32; packed: output of pack_params (cached, not rebuilt here)."""
    B, D_in = x.shape
    w0p, b0p, w1bd, b1p, w2bd, b2p, red = packed
    MH1 = w0p.shape[1]
    MH2 = w1bd.shape[1]
    MO2 = w2bd.shape[1]          # 2 * M * O
    O = output_dim

    TB = _choose_batch_tile(B)
    nb = B // TB

    shared = lambda i: (0, 0)    # weights / biases: same block every batch tile

    grid_spec = pltpu.PrefetchScalarGridSpec(
        num_scalar_prefetch=0,
        grid=(nb,),
        in_specs=[
            pl.BlockSpec((TB, D_in), lambda i: (i, 0)),   # x (batch-tiled)
            pl.BlockSpec((D_in, MH1), shared),            # w0 fused
            pl.BlockSpec((1, MH1), shared),               # b0 fused
            pl.BlockSpec((MH1, MH2), shared),             # w1 block-diag
            pl.BlockSpec((1, MH2), shared),               # b1 fused
            pl.BlockSpec((MH2, MO2), shared),             # fused mu|var head
            pl.BlockSpec((1, MO2), shared),               # fused head bias
            pl.BlockSpec((MO2, 2 * O), shared),           # fused mixture reducer
        ],
        out_specs=pl.BlockSpec((TB, 2 * O), lambda i: (i, 0)),
    )

    flops = 2 * B * (D_in * MH1 + MH1 * MH2 + MH2 * MO2 + MO2 * 2 * O)
    transcendentals = B * (MO2 // 2)   # softplus on the var head
    bytes_accessed = 4 * (B * D_in + B * 2 * O
                          + D_in * MH1 + MH1 + MH1 * MH2 + MH2
                          + MH2 * MO2 + MO2 + MO2 * 2 * O)

    out = pl.pallas_call(
        _fused_ensemble_kernel,
        grid_spec=grid_spec,
        out_shape=jax.ShapeDtypeStruct((B, 2 * O), jnp.float32),
        compiler_params=pltpu.CompilerParams(
            dimension_semantics=("parallel",)),
        cost_estimate=pl.CostEstimate(
            flops=flops,
            transcendentals=transcendentals,
            bytes_accessed=bytes_accessed),
    )(x, w0p, b0p, w1bd, b1p, w2bd, b2p, red)

    return out[:, :O], out[:, O:]


# ----------------------------------------------------------------------------
# Init + pure-JAX reference (PyTorch-module semantics).
# ----------------------------------------------------------------------------
def init_params(key, n_models, input_dim, output_dim, hidden_layers):
    """Deterministic PyTorch-style init: U(-1/sqrt(fan_in), 1/sqrt(fan_in))."""
    dims = [input_dim, *hidden_layers, 2 * output_dim]
    params = {}
    for li in range(len(dims) - 1):
        fan_in, fan_out = dims[li], dims[li + 1]
        k = 1.0 / jnp.sqrt(fan_in)
        key, kw, kb = jax.random.split(key, 3)
        params[f"w{li}"] = jax.random.uniform(
            kw, (n_models, fan_out, fan_in), jnp.float32, -k, k)
        params[f"b{li}"] = jax.random.uniform(
            kb, (n_models, 1, fan_out), jnp.float32, -k, k)
    return params


def reference_forward(x, params, output_dim):
    """Pure-JAX reference matching the PyTorch GaussianMixtureMLP forward."""
    n_models = params["w0"].shape[0]
    mus, vars_ = [], []
    for m in range(n_models):
        h = x
        h = jax.nn.relu(h @ params["w0"][m].T + params["b0"][m])
        h = jax.nn.relu(h @ params["w1"][m].T + params["b1"][m])
        y = h @ params["w2"][m].T + params["b2"][m]
        mu = y[:, :output_dim]
        var = jax.nn.softplus(y[:, output_dim:]) + 1e-6
        mus.append(mu)
        vars_.append(var)
    mus = jnp.stack(mus)
    vs = jnp.stack(vars_)
    mu = mus.mean(axis=0)
    var = (vs + mus ** 2).mean(axis=0) - mu ** 2
    return mu, var


if __name__ == "__main__":
    # Small shapes consistent with the module defaults.
    n_models = 4
    input_dim = 4
    output_dim = 2
    hidden_layers = [32, 32]   # -> M*H1 = M*H2 = 128 lanes (one native MXU pass on v5e)
    batch = 8

    key = jax.random.PRNGKey(0)
    key, kx = jax.random.split(key)
    x = jax.random.normal(kx, (batch, input_dim), jnp.float32)
    params = init_params(key, n_models, input_dim, output_dim, hidden_layers)

    # One-time packing (hoisted out of the per-call forward path).
    packed = pack_params(params)
    packed = jax.block_until_ready(packed)

    mu, var = gaussian_mixture_mlp_forward(x, packed, output_dim)
    mu = jax.block_until_ready(mu)
    var = jax.block_until_ready(var)

    mu_ref, var_ref = reference_forward(x, params, output_dim)
    assert jnp.allclose(mu, mu_ref, rtol=1e-4, atol=1e-5), "mu mismatch"
    assert jnp.allclose(var, var_ref, rtol=1e-4, atol=1e-5), "var mismatch"

    print("KERNEL_OK")
</pallas_src>

<mosaic_0001>
module attributes {stable_mosaic.version = 11 : i64} {
  func.func @_fused_ensemble_kernel(%arg0: i32, %arg1: memref<8x4xf32, #tpu.memory_space<vmem>>, %arg2: memref<4x128xf32, #tpu.memory_space<vmem>>, %arg3: memref<1x128xf32, #tpu.memory_space<vmem>>, %arg4: memref<128x128xf32, #tpu.memory_space<vmem>>, %arg5: memref<1x128xf32, #tpu.memory_space<vmem>>, %arg6: memref<128x16xf32, #tpu.memory_space<vmem>>, %arg7: memref<1x16xf32, #tpu.memory_space<vmem>>, %arg8: memref<16x4xf32, #tpu.memory_space<vmem>>, %arg9: memref<8x4xf32, #tpu.memory_space<vmem>>) attributes {dimension_semantics = [#tpu.dimension_semantics<parallel>], iteration_bounds = array<i64: 1>, scalar_prefetch = 0 : i64, scratch_operands = 0 : i64, tpu.core_type = #tpu.core_type<tc>, window_params = [{transform_indices = @transform_0, window_bounds = array<i64: 8, 4>}, {pipeline_mode = #tpu.pipeline_mode<synchronous>, transform_indices = @transform_1, window_bounds = array<i64: 4, 128>}, {pipeline_mode = #tpu.pipeline_mode<synchronous>, transform_indices = @transform_2, window_bounds = array<i64: 1, 128>}, {pipeline_mode = #tpu.pipeline_mode<synchronous>, transform_indices = @transform_3, window_bounds = array<i64: 128, 128>}, {pipeline_mode = #tpu.pipeline_mode<synchronous>, transform_indices = @transform_4, window_bounds = array<i64: 1, 128>}, {pipeline_mode = #tpu.pipeline_mode<synchronous>, transform_indices = @transform_5, window_bounds = array<i64: 128, 16>}, {pipeline_mode = #tpu.pipeline_mode<synchronous>, transform_indices = @transform_6, window_bounds = array<i64: 1, 16>}, {pipeline_mode = #tpu.pipeline_mode<synchronous>, transform_indices = @transform_7, window_bounds = array<i64: 16, 4>}, {transform_indices = @transform_8, window_bounds = array<i64: 8, 4>}]} {
    %c0 = arith.constant 0 : index
    %c0_0 = arith.constant 0 : index
    %0 = vector.load %arg1[%c0, %c0_0] : memref<8x4xf32, #tpu.memory_space<vmem>>, vector<8x4xf32>
    %c0_1 = arith.constant 0 : index
    %c0_2 = arith.constant 0 : index
    %1 = vector.load %arg2[%c0_1, %c0_2] : memref<4x128xf32, #tpu.memory_space<vmem>>, vector<4x128xf32>
    %cst = arith.constant dense<0.000000e+00> : vector<8x128xf32>
    %2 = tpu.matmul %0, %1, %cst {dimension_numbers = #tpu.dot_dimension_numbers<[1], [0], [0], [1], [0, 0, 1, 1], [], []>} : vector<8x4xf32>, vector<4x128xf32>, vector<8x128xf32> -> vector<8x128xf32>
    %c0_3 = arith.constant 0 : index
    %c0_4 = arith.constant 0 : index
    %3 = vector.load %arg3[%c0_3, %c0_4] : memref<1x128xf32, #tpu.memory_space<vmem>>, vector<1x128xf32>
    %4 = vector.broadcast %3 : vector<1x128xf32> to vector<8x128xf32>
    %5 = arith.addf %2, %4 : vector<8x128xf32>
    %cst_5 = arith.constant 0.000000e+00 : f32
    %6 = vector.broadcast %cst_5 : f32 to vector<8x128xf32>
    %7 = arith.maximumf %5, %6 : vector<8x128xf32>
    %c0_6 = arith.constant 0 : index
    %c0_7 = arith.constant 0 : index
    %8 = vector.load %arg4[%c0_6, %c0_7] : memref<128x128xf32, #tpu.memory_space<vmem>>, vector<128x128xf32>
    %cst_8 = arith.constant dense<0.000000e+00> : vector<8x128xf32>
    %9 = tpu.matmul %7, %8, %cst_8 {dimension_numbers = #tpu.dot_dimension_numbers<[1], [0], [0], [1], [0, 0, 1, 1], [], []>} : vector<8x128xf32>, vector<128x128xf32>, vector<8x128xf32> -> vector<8x128xf32>
    %c0_9 = arith.constant 0 : index
    %c0_10 = arith.constant 0 : index
    %10 = vector.load %arg5[%c0_9, %c0_10] : memref<1x128xf32, #tpu.memory_space<vmem>>, vector<1x128xf32>
    %11 = vector.broadcast %10 : vector<1x128xf32> to vector<8x128xf32>
    %12 = arith.addf %9, %11 : vector<8x128xf32>
    %cst_11 = arith.constant 0.000000e+00 : f32
    %13 = vector.broadcast %cst_11 : f32 to vector<8x128xf32>
    %14 = arith.maximumf %12, %13 : vector<8x128xf32>
    %c0_12 = arith.constant 0 : index
    %c0_13 = arith.constant 0 : index
    %15 = vector.load %arg6[%c0_12, %c0_13] : memref<128x16xf32, #tpu.memory_space<vmem>>, vector<128x16xf32>
    %cst_14 = arith.constant dense<0.000000e+00> : vector<8x16xf32>
    %16 = tpu.matmul %14, %15, %cst_14 {dimension_numbers = #tpu.dot_dimension_numbers<[1], [0], [0], [1], [0, 0, 1, 1], [], []>} : vector<8x128xf32>, vector<128x16xf32>, vector<8x16xf32> -> vector<8x16xf32>
    %c0_15 = arith.constant 0 : index
    %c0_16 = arith.constant 0 : index
    %17 = vector.load %arg7[%c0_15, %c0_16] : memref<1x16xf32, #tpu.memory_space<vmem>>, vector<1x16xf32>
    %18 = vector.broadcast %17 : vector<1x16xf32> to vector<8x16xf32>
    %19 = arith.addf %16, %18 : vector<8x16xf32>
    %20 = vector.extract_strided_slice %19 {offsets = [0, 0], sizes = [8, 8], strides = [1, 1]} : vector<8x16xf32> to vector<8x8xf32>
    %21 = vector.extract_strided_slice %19 {offsets = [0, 8], sizes = [8, 8], strides = [1, 1]} : vector<8x16xf32> to vector<8x8xf32>
    %cst_17 = arith.constant 0.000000e+00 : f32
    %22 = vector.broadcast %cst_17 : f32 to vector<8x8xf32>
    %23 = arith.maximumf %21, %22 : vector<8x8xf32>
    %24 = vector.broadcast %cst_17 : f32 to vector<8x8xf32>
    %25 = arith.subf %21, %24 : vector<8x8xf32>
    %26 = arith.cmpf one, %25, %25 : vector<8x8xf32>
    %27 = vector.broadcast %cst_17 : f32 to vector<8x8xf32>
    %28 = arith.addf %21, %27 : vector<8x8xf32>
    %29 = math.absf %25 : vector<8x8xf32>
    %cst_18 = arith.constant 0.000000e+00 : f32
    %30 = vector.broadcast %cst_18 : f32 to vector<8x8xf32>
    %31 = arith.subf %30, %29 : vector<8x8xf32>
    %32 = math.exp %31 : vector<8x8xf32>
    %33 = math.log1p %32 : vector<8x8xf32>
    %34 = arith.addf %23, %33 : vector<8x8xf32>
    %35 = arith.select %26, %28, %34 : vector<8x8xi1>, vector<8x8xf32>
    %cst_19 = arith.constant 9.99999997E-7 : f32
    %36 = vector.broadcast %cst_19 : f32 to vector<8x8xf32>
    %37 = arith.addf %35, %36 : vector<8x8xf32>
    %38 = arith.mulf %20, %20 : vector<8x8xf32>
    %39 = arith.addf %37, %38 : vector<8x8xf32>
    %40 = tpu.concatenate %20, %39 in 1 : vector<8x8xf32>, vector<8x8xf32> -> vector<8x16xf32>
    %c0_20 = arith.constant 0 : index
    %c0_21 = arith.constant 0 : index
    %41 = vector.load %arg8[%c0_20, %c0_21] : memref<16x4xf32, #tpu.memory_space<vmem>>, vector<16x4xf32>
    %cst_22 = arith.constant dense<0.000000e+00> : vector<8x4xf32>
    %42 = tpu.matmul %40, %41, %cst_22 {dimension_numbers = #tpu.dot_dimension_numbers<[1], [0], [0], [1], [0, 0, 1, 1], [], []>} : vector<8x16xf32>, vector<16x4xf32>, vector<8x4xf32> -> vector<8x4xf32>
    %43 = vector.extract_strided_slice %42 {offsets = [0, 0], sizes = [8, 2], strides = [1, 1]} : vector<8x4xf32> to vector<8x2xf32>
    %44 = vector.extract_strided_slice %42 {offsets = [0, 2], sizes = [8, 2], strides = [1, 1]} : vector<8x4xf32> to vector<8x2xf32>
    %45 = arith.mulf %43, %43 : vector<8x2xf32>
    %46 = arith.subf %44, %45 : vector<8x2xf32>
    %47 = tpu.concatenate %43, %46 in 1 : vector<8x2xf32>, vector<8x2xf32> -> vector<8x4xf32>
    %c0_23 = arith.constant 0 : index
    %c0_24 = arith.constant 0 : index
    %48 = vector.load %arg9[%c0_23, %c0_24] : memref<8x4xf32, #tpu.memory_space<vmem>>, vector<8x4xf32>
    tpu.vector_store %arg9[%c0_23, %c0_24], %47 {strides = array<i32>} : memref<8x4xf32, #tpu.memory_space<vmem>>, vector<8x4xf32>,
    return
  }
  func.func @transform_0(%arg0: i32) -> (i32, i32) {
    %c0_i32 = arith.constant 0 : i32
    %c0_i32_0 = arith.constant 0 : i32
    return %arg0, %c0_i32 : i32, i32
  }
  func.func @transform_1(%arg0: i32) -> (i32, i32) {
    %c0_i32 = arith.constant 0 : i32
    %c0_i32_0 = arith.constant 0 : i32
    %c0_i32_1 = arith.constant 0 : i32
    return %c0_i32, %c0_i32_0 : i32, i32
  }
  func.func @transform_2(%arg0: i32) -> (i32, i32) {
    %c0_i32 = arith.constant 0 : i32
    %c0_i32_0 = arith.constant 0 : i32
    %c0_i32_1 = arith.constant 0 : i32
    return %c0_i32, %c0_i32_0 : i32, i32
  }
  func.func @transform_3(%arg0: i32) -> (i32, i32) {
    %c0_i32 = arith.constant 0 : i32
    %c0_i32_0 = arith.constant 0 : i32
    %c0_i32_1 = arith.constant 0 : i32
    return %c0_i32, %c0_i32_0 : i32, i32
  }
  func.func @transform_4(%arg0: i32) -> (i32, i32) {
    %c0_i32 = arith.constant 0 : i32
    %c0_i32_0 = arith.constant 0 : i32
    %c0_i32_1 = arith.constant 0 : i32
    return %c0_i32, %c0_i32_0 : i32, i32
  }
  func.func @transform_5(%arg0: i32) -> (i32, i32) {
    %c0_i32 = arith.constant 0 : i32
    %c0_i32_0 = arith.constant 0 : i32
    %c0_i32_1 = arith.constant 0 : i32
    return %c0_i32, %c0_i32_0 : i32, i32
  }
  func.func @transform_6(%arg0: i32) -> (i32, i32) {
    %c0_i32 = arith.constant 0 : i32
    %c0_i32_0 = arith.constant 0 : i32
    %c0_i32_1 = arith.constant 0 : i32
    return %c0_i32, %c0_i32_0 : i32, i32
  }
  func.func @transform_7(%arg0: i32) -> (i32, i32) {
    %c0_i32 = arith.constant 0 : i32
    %c0_i32_0 = arith.constant 0 : i32
    %c0_i32_1 = arith.constant 0 : i32
    return %c0_i32, %c0_i32_0 : i32, i32
  }
  func.func @transform_8(%arg0: i32) -> (i32, i32) {
    %c0_i32 = arith.constant 0 : i32
    %c0_i32_0 = arith.constant 0 : i32
    return %arg0, %c0_i32 : i32, i32
  }
}

</mosaic_0001>

<llo_original>
// kernel: tpu_custom_call.1
$region0: #{tpu_custom_call.1}
  #allocation0 [shape = 'u32[]', space=smem, size = 0x4, offset = 0x4, fixed_abs, tag = 'smem constant byte address 0x4 - core index']
  #allocation1 [shape = 'u32[144,128]{1,0:T(1,128)}', space=vmem, size = 0x12000, scoped, tag = 'internal scratch']
  %s0 = inlined_call_operand.vmem [shape: f32[8,4], index: 0, kind: input, shape index: {}]
  %s1 = inlined_call_operand.vmem [shape: f32[4,128], index: 1, kind: input, shape index: {}]
  %s2 = inlined_call_operand.vmem [shape: f32[1,128], index: 2, kind: input, shape index: {}]
  %s3 = inlined_call_operand.vmem [shape: f32[128,128], index: 3, kind: input, shape index: {}]
  %s4 = inlined_call_operand.vmem [shape: f32[1,128], index: 4, kind: input, shape index: {}]
  %s5 = inlined_call_operand.vmem [shape: f32[128,16], index: 5, kind: input, shape index: {}]
  %s6 = inlined_call_operand.vmem [shape: f32[1,16], index: 6, kind: input, shape index: {}]
  %s7 = inlined_call_operand.vmem [shape: f32[16,4], index: 7, kind: input, shape index: {}]
  %s8 = inlined_call_operand.vmem [shape: f32[8,4], index: 8, kind: output, shape index: {}]
  %s9 = sld [smem:[#allocation0]]
  $region42: #{tpu_custom_call.1} parent=0
    _
  %s11 = ssub.s32 1, %s9
  %s12 = scalar_select 0, %s11, %s9
  // Predicated region
  $region2: #{tpu_custom_call.1} parent=0 // pred_check
    _
  $region3: #{tpu_custom_call.1} parent=0 // pred_check_branch
    %14 = sbr.rel (0) target = $region5
  $region4: #{tpu_custom_call.1} parent=0 // pred_region
    _
  $region5: #{tpu_custom_call.1} parent=0 // pred_fallthru
    _
  // Predicated region
  $region6: #{tpu_custom_call.1} parent=0 // pred_check
    _
  $region7: #{tpu_custom_call.1} parent=0 // pred_check_branch
    %16 = sbr.rel (0) target = $region9
  $region8: #{tpu_custom_call.1} parent=0 // pred_region
    _
  $region9: #{tpu_custom_call.1} parent=0 // pred_fallthru
    _
  // Predicated region
  $region10: #{tpu_custom_call.1} parent=0 // pred_check
    _
  $region11: #{tpu_custom_call.1} parent=0 // pred_check_branch
    %18 = sbr.rel (0) target = $region13
  $region12: #{tpu_custom_call.1} parent=0 // pred_region
    _
  $region13: #{tpu_custom_call.1} parent=0 // pred_fallthru
    _
  // Predicated region
  $region14: #{tpu_custom_call.1} parent=0 // pred_check
    _
  $region15: #{tpu_custom_call.1} parent=0 // pred_check_branch
    %20 = sbr.rel (0) target = $region17
  $region16: #{tpu_custom_call.1} parent=0 // pred_region
    _
  $region17: #{tpu_custom_call.1} parent=0 // pred_fallthru
    _
  // Predicated region
  $region18: #{tpu_custom_call.1} parent=0 // pred_check
    _
  $region19: #{tpu_custom_call.1} parent=0 // pred_check_branch
    %22 = sbr.rel (0) target = $region21
  $region20: #{tpu_custom_call.1} parent=0 // pred_region
    _
  $region21: #{tpu_custom_call.1} parent=0 // pred_fallthru
    _
  // Predicated region
  $region22: #{tpu_custom_call.1} parent=0 // pred_check
    _
  $region23: #{tpu_custom_call.1} parent=0 // pred_check_branch
    %24 = sbr.rel (0) target = $region25
  $region24: #{tpu_custom_call.1} parent=0 // pred_region
    _
  $region25: #{tpu_custom_call.1} parent=0 // pred_fallthru
    _
  // Predicated region
  $region26: #{tpu_custom_call.1} parent=0 // pred_check
    _
  $region27: #{tpu_custom_call.1} parent=0 // pred_check_branch
    %26 = sbr.rel (0) target = $region29
  $region28: #{tpu_custom_call.1} parent=0 // pred_region
    _
  $region29: #{tpu_custom_call.1} parent=0 // pred_fallthru
    _
  // Predicated region
  $region30: #{tpu_custom_call.1} parent=0 // pred_check
    _
  $region31: #{tpu_custom_call.1} parent=0 // pred_check_branch
    %28 = sbr.rel (0) target = $region33
  $region32: #{tpu_custom_call.1} parent=0 // pred_region
    _
  $region33: #{tpu_custom_call.1} parent=0 // pred_fallthru
    _
  %v29 = vld [vmem:[%s0] sm:$0xff]
  %v30 = vld [vmem:[%s1] sm:$0xf]
  %v31 = vld [vmem:[%s2] sm:$0x1]
  %v33 = vlaneseq
  %v34 = vshrl.u32 %v33, 7
  %v35 = vsub.s32 0, %v34
  %v36 = vrot.slane %v31, %v35
  %vm38 = vcmask 31744
  %v40 = vsel %vm38, %v29, 0
  %vm42 = vcmask 1043456
  %v44 = vsel %vm42, %v30, 0
  %46 = vmatprep.subr.mxu0 0.0
  %47 = vmatpush1.msra.mxu0 %v44
  %48 = vmatprep.subr.mxu0 0.0
  %49 = vmatpush1.msra.mxu0 0.0
  %50 = vmatprep.subr.mxu0 0.0
  %51 = vmatpush1.msra.mxu0 0.0
  %52 = vmatprep.subr.mxu0 0.0
  %53 = vmatpush1.msra.mxu0 0.0
  %54 = vmatprep.subr.mxu0 0.0
  %55 = vmatpush1.msra.mxu0 0.0
  %56 = vmatprep.subr.mxu0 0.0
  %57 = vmatpush1.msra.mxu0 0.0
  %58 = vmatprep.subr.mxu0 0.0
  %59 = vmatpush1.msra.mxu0 0.0
  %60 = vmatprep.subr.mxu0 0.0
  %61 = vmatpush1.msra.mxu0 0.0
  %62 = vmatprep.subr.mxu0 0.0
  %63 = vmatpush1.msra.mxu0 0.0
  %64 = vmatprep.subr.mxu0 0.0
  %65 = vmatpush1.msra.mxu0 0.0
  %66 = vmatprep.subr.mxu0 0.0
  %67 = vmatpush1.msra.mxu0 0.0
  %68 = vmatprep.subr.mxu0 0.0
  %69 = vmatpush1.msra.mxu0 0.0
  %70 = vmatprep.subr.mxu0 0.0
  %71 = vmatpush1.msra.mxu0 0.0
  %72 = vmatprep.subr.mxu0 0.0
  %73 = vmatpush1.msra.mxu0 0.0
  %74 = vmatprep.subr.mxu0 0.0
  %75 = vmatpush1.msra.mxu0 0.0
  %76 = vmatprep.subr.mxu0 0.0
  %77 = vmatpush1.msra.mxu0 0.0
  %78 = vmatprep.subr.mxu0 0.0
  %79 = vmatpush1.msra.mxu0 0.0
  %80 = vmatprep.subr.mxu0 0.0
  %81 = vmatpush1.msra.mxu0 0.0
  %82 = vmatprep.subr.mxu0 0.0
  %83 = vmatpush1.msra.mxu0 0.0
  %84 = vmatprep.subr.mxu0 0.0
  %85 = vmatpush1.msra.mxu0 0.0
  %86 = vmatprep.subr.mxu0 0.0
  %87 = vmatpush1.msra.mxu0 0.0
  %88 = vmatprep.subr.mxu0 0.0
  %89 = vmatpush1.msra.mxu0 0.0
  %90 = vmatprep.subr.mxu0 0.0
  %91 = vmatpush1.msra.mxu0 0.0
  %92 = vmatprep.subr.mxu0 0.0
  %93 = vmatpush1.msra.mxu0 0.0
  %94 = vmatprep.subr.mxu0 0.0
  %95 = vmatpush1.msra.mxu0 0.0
  %96 = vmatprep.subr.mxu0 0.0
  %97 = vmatpush1.msra.mxu0 0.0
  %98 = vmatprep.subr.mxu0 0.0
  %99 = vmatpush1.msra.mxu0 0.0
  %100 = vmatprep.subr.mxu0 0.0
  %101 = vmatpush1.msra.mxu0 0.0
  %102 = vmatprep.subr.mxu0 0.0
  %103 = vmatpush1.msra.mxu0 0.0
  %104 = vmatprep.subr.mxu0 0.0
  %105 = vmatpush1.msra.mxu0 0.0
  %106 = vmatprep.subr.mxu0 0.0
  %107 = vmatpush1.msra.mxu0 0.0
  %108 = vmatprep.subr.mxu0 0.0
  %109 = vmatpush1.msra.mxu0 0.0
  %110 = vmatprep.mubr.f32.mxu0 0.0
  %111 = vmatmul.mubr.f32.gmra.mrb[0].mxu0 %v40
  %v112 = vpop.f32.mrb[0].mxu0
  %v113 = vadd.f32 %v36, %v112
  %v114 = vpop.f32.mrb[0].mxu0
  %115 = vdwg.mxu0
  %v116 = vmax.f32 %v113, 0.0
  %v117 = vld [vmem:[%s3] sm:$0xff]
  %v118 = vld [vmem:[%s3 + $0x8] sm:$0xff]
  %v119 = vld [vmem:[%s3 + $0x10] sm:$0xff]
  %v120 = vld [vmem:[%s3 + $0x18] sm:$0xff]
  %v121 = vld [vmem:[%s3 + $0x20] sm:$0xff]
  %v122 = vld [vmem:[%s3 + $0x28] sm:$0xff]
  %v123 = vld [vmem:[%s3 + $0x30] sm:$0xff]
  %v124 = vld [vmem:[%s3 + $0x38] sm:$0xff]
  %v125 = vld [vmem:[%s3 + $0x40] sm:$0xff]
  %v126 = vld [vmem:[%s3 + $0x48] sm:$0xff]
  %v127 = vld [vmem:[%s3 + $0x50] sm:$0xff]
  %v128 = vld [vmem:[%s3 + $0x58] sm:$0xff]
  %v129 = vld [vmem:[%s3 + $0x60] sm:$0xff]
  %v130 = vld [vmem:[%s3 + $0x68] sm:$0xff]
  %v131 = vld [vmem:[%s3 + $0x70] sm:$0xff]
  %v132 = vld [vmem:[%s3 + $0x78] sm:$0xff]
  %v133 = vld [vmem:[%s4] sm:$0x1]
  %v135 = vlaneseq
  %v136 = vshrl.u32 %v135, 7
  %v137 = vsub.s32 0, %v136
  %v138 = vrot.slane %v133, %v137
  %140 = vmatprep.subr.mxu0 0.0
  %141 = vmatpush1.msra.mxu0 %v117
  %142 = vmatprep.subr.mxu0 0.0
  %143 = vmatpush1.msra.mxu0 %v118
  %144 = vmatprep.subr.mxu0 0.0
  %145 = vmatpush1.msra.mxu0 %v119
  %146 = vmatprep.subr.mxu0 0.0
  %147 = vmatpush1.msra.mxu0 %v120
  %148 = vmatprep.subr.mxu0 0.0
  %149 = vmatpush1.msra.mxu0 %v121
  %150 = vmatprep.subr.mxu0 0.0
  %151 = vmatpush1.msra.mxu0 %v122
  %152 = vmatprep.subr.mxu0 0.0
  %153 = vmatpush1.msra.mxu0 %v123
  %154 = vmatprep.subr.mxu0 0.0
  %155 = vmatpush1.msra.mxu0 %v124
  %156 = vmatprep.subr.mxu0 0.0
  %157 = vmatpush1.msra.mxu0 %v125
  %158 = vmatprep.subr.mxu0 0.0
  %159 = vmatpush1.msra.mxu0 %v126
  %160 = vmatprep.subr.mxu0 0.0
  %161 = vmatpush1.msra.mxu0 %v127
  %162 = vmatprep.subr.mxu0 0.0
  %163 = vmatpush1.msra.mxu0 %v128
  %164 = vmatprep.subr.mxu0 0.0
  %165 = vmatpush1.msra.mxu0 %v129
  %166 = vmatprep.subr.mxu0 0.0
  %167 = vmatpush1.msra.mxu0 %v130
  %168 = vmatprep.subr.mxu0 0.0
  %169 = vmatpush1.msra.mxu0 %v131
  %170 = vmatprep.subr.mxu0 0.0
  %171 = vmatpush1.msra.mxu0 %v132
  %172 = vmatprep.subr.mxu0 0.0
  %173 = vmatpush1.msra.mxu0 0.0
  %174 = vmatprep.subr.mxu0 0.0
  %175 = vmatpush1.msra.mxu0 0.0
  %176 = vmatprep.subr.mxu0 0.0
  %177 = vmatpush1.msra.mxu0 0.0
  %178 = vmatprep.subr.mxu0 0.0
  %179 = vmatpush1.msra.mxu0 0.0
  %180 = vmatprep.subr.mxu0 0.0
  %181 = vmatpush1.msra.mxu0 0.0
  %182 = vmatprep.subr.mxu0 0.0
  %183 = vmatpush1.msra.mxu0 0.0
  %184 = vmatprep.subr.mxu0 0.0
  %185 = vmatpush1.msra.mxu0 0.0
  %186 = vmatprep.subr.mxu0 0.0
  %187 = vmatpush1.msra.mxu0 0.0
  %188 = vmatprep.subr.mxu0 0.0
  %189 = vmatpush1.msra.mxu0 0.0
  %190 = vmatprep.subr.mxu0 0.0
  %191 = vmatpush1.msra.mxu0 0.0
  %192 = vmatprep.subr.mxu0 0.0
  %193 = vmatpush1.msra.mxu0 0.0
  %194 = vmatprep.subr.mxu0 0.0
  %195 = vmatpush1.msra.mxu0 0.0
  %196 = vmatprep.subr.mxu0 0.0
  %197 = vmatpush1.msra.mxu0 0.0
  %198 = vmatprep.subr.mxu0 0.0
  %199 = vmatpush1.msra.mxu0 0.0
  %200 = vmatprep.subr.mxu0 0.0
  %201 = vmatpush1.msra.mxu0 0.0
  %202 = vmatprep.subr.mxu0 0.0
  %203 = vmatpush1.msra.mxu0 0.0
  %204 = vmatprep.mubr.f32.mxu0 0.0
  %205 = vmatmul.mubr.f32.gmra.mrb[0].mxu0 %v116
  %v206 = vpop.f32.mrb[0].mxu0
  %v207 = vadd.f32 %v138, %v206
  %v208 = vpop.f32.mrb[0].mxu0
  %209 = vdwg.mxu0
  %v210 = vmax.f32 %v207, 0.0
  %v211 = vld [vmem:[%s5] sm:$0xff]
  %v212 = vld [vmem:[%s5 + $0x8] sm:$0xff]
  %v213 = vld [vmem:[%s5 + $0x10] sm:$0xff]
  %v214 = vld [vmem:[%s5 + $0x18] sm:$0xff]
  %v215 = vld [vmem:[%s5 + $0x20] sm:$0xff]
  %v216 = vld [vmem:[%s5 + $0x28] sm:$0xff]
  %v217 = vld [vmem:[%s5 + $0x30] sm:$0xff]
  %v218 = vld [vmem:[%s5 + $0x38] sm:$0xff]
  %v219 = vld [vmem:[%s5 + $0x40] sm:$0xff]
  %v220 = vld [vmem:[%s5 + $0x48] sm:$0xff]
  %v221 = vld [vmem:[%s5 + $0x50] sm:$0xff]
  %v222 = vld [vmem:[%s5 + $0x58] sm:$0xff]
  %v223 = vld [vmem:[%s5 + $0x60] sm:$0xff]
  %v224 = vld [vmem:[%s5 + $0x68] sm:$0xff]
  %v225 = vld [vmem:[%s5 + $0x70] sm:$0xff]
  %v226 = vld [vmem:[%s5 + $0x78] sm:$0xff]
  %v227 = vld [vmem:[%s6] sm:$0x1]
  %v229 = vlaneseq
  %v230 = vshrl.u32 %v229, 7
  %v231 = vsub.s32 0, %v230
  %v232 = vrot.slane %v227, %v231
  %234 = vmatprep.subr.mxu0 0.0
  %235 = vmatpush1.msra.mxu0 %v211
  %236 = vmatprep.subr.mxu0 0.0
  %237 = vmatpush1.msra.mxu0 %v212
  %238 = vmatprep.subr.mxu0 0.0
  %239 = vmatpush1.msra.mxu0 %v213
  %240 = vmatprep.subr.mxu0 0.0
  %241 = vmatpush1.msra.mxu0 %v214
  %242 = vmatprep.subr.mxu0 0.0
  %243 = vmatpush1.msra.mxu0 %v215
  %244 = vmatprep.subr.mxu0 0.0
  %245 = vmatpush1.msra.mxu0 %v216
  %246 = vmatprep.subr.mxu0 0.0
  %247 = vmatpush1.msra.mxu0 %v217
  %248 = vmatprep.subr.mxu0 0.0
  %249 = vmatpush1.msra.mxu0 %v218
  %250 = vmatprep.subr.mxu0 0.0
  %251 = vmatpush1.msra.mxu0 %v219
  %252 = vmatprep.subr.mxu0 0.0
  %253 = vmatpush1.msra.mxu0 %v220
  %254 = vmatprep.subr.mxu0 0.0
  %255 = vmatpush1.msra.mxu0 %v221
  %256 = vmatprep.subr.mxu0 0.0
  %257 = vmatpush1.msra.mxu0 %v222
  %258 = vmatprep.subr.mxu0 0.0
  %259 = vmatpush1.msra.mxu0 %v223
  %260 = vmatprep.subr.mxu0 0.0
  %261 = vmatpush1.msra.mxu0 %v224
  %262 = vmatprep.subr.mxu0 0.0
  %263 = vmatpush1.msra.mxu0 %v225
  %264 = vmatprep.subr.mxu0 0.0
  %265 = vmatpush1.msra.mxu0 %v226
  %266 = vmatprep.subr.mxu0 0.0
  %267 = vmatpush1.msra.mxu0 0.0
  %268 = vmatprep.subr.mxu0 0.0
  %269 = vmatpush1.msra.mxu0 0.0
  %270 = vmatprep.subr.mxu0 0.0
  %271 = vmatpush1.msra.mxu0 0.0
  %272 = vmatprep.subr.mxu0 0.0
  %273 = vmatpush1.msra.mxu0 0.0
  %274 = vmatprep.subr.mxu0 0.0
  %275 = vmatpush1.msra.mxu0 0.0
  %276 = vmatprep.subr.mxu0 0.0
  %277 = vmatpush1.msra.mxu0 0.0
  %278 = vmatprep.subr.mxu0 0.0
  %279 = vmatpush1.msra.mxu0 0.0
  %280 = vmatprep.subr.mxu0 0.0
  %281 = vmatpush1.msra.mxu0 0.0
  %282 = vmatprep.subr.mxu0 0.0
  %283 = vmatpush1.msra.mxu0 0.0
  %284 = vmatprep.subr.mxu0 0.0
  %285 = vmatpush1.msra.mxu0 0.0
  %286 = vmatprep.subr.mxu0 0.0
  %287 = vmatpush1.msra.mxu0 0.0
  %288 = vmatprep.subr.mxu0 0.0
  %289 = vmatpush1.msra.mxu0 0.0
  %290 = vmatprep.subr.mxu0 0.0
  %291 = vmatpush1.msra.mxu0 0.0
  %292 = vmatprep.subr.mxu0 0.0
  %293 = vmatpush1.msra.mxu0 0.0
  %294 = vmatprep.subr.mxu0 0.0
  %295 = vmatpush1.msra.mxu0 0.0
  %296 = vmatprep.subr.mxu0 0.0
  %297 = vmatpush1.msra.mxu0 0.0
  %298 = vmatprep.mubr.f32.mxu0 0.0
  %299 = vmatmul.mubr.f32.gmra.mrb[0].mxu0 %v210
  %v300 = vpop.f32.mrb[0].mxu0
  %v301 = vadd.f32 %v232, %v300
  %v302 = vpop.f32.mrb[0].mxu0
  %303 = vdwg.mxu0
  %v304 = vmax.f32 %v301, 0.0
  %vm305 = vcmp.ne.f32.partialorder %v301, %v301
  %v306 = vadd.f32 %v301, 0.0
  %v307 = vand.u32 2147483647, %v301
  %v308 = vsub.f32 0.0, %v307
  %v309 = vmul.f32 %v308, 1.442695
  %v310 = vpow.pop %v309
  %v311 = vadd.f32 %v310, 1.0
  %v312 = vlog2.pop %v311
  %v313 = vmul.f32 %v312, 0.6931472
  %v314 = vmul.f32 -0.5, %v310
  %v315 = vadd.f32 %v314, 1.0
  %v316 = vmul.f32 %v315, %v310
  %v317 = vand.u32 2147483647, %v310
  %vm318 = vcmp.lt.f32.partialorder %v317, 0.0004427343
  %v319 = vsel %vm318, %v316, %v313
  %v320 = vadd.f32 %v304, %v319
  %v321 = vsel %vm305, %v306, %v320
  %v322 = vadd.f32 %v321, 1e-06
  %v323 = vmul.f32 %v301, %v301
  %325 = vrot.lane.b32.xlu0 %v323, 8
  %v326 = vpop.permute.xlu0 %325
  %v328 = vadd.f32 %v322, %v326
  %vm329 = vcmask 64512
  %v330 = vsel %vm329, %v301, %v328
  %v331 = vld [vmem:[%s7] sm:$0xff]
  %v332 = vld [vmem:[%s7 + $0x8] sm:$0xff]
  %vm333 = vcmask 130048
  %v335 = vsel %vm333, %v330, 0
  %337 = vmatprep.subr.mxu0 0.0
  %338 = vmatpush1.msra.mxu0 %v331
  %339 = vmatprep.subr.mxu0 0.0
  %340 = vmatpush1.msra.mxu0 %v332
  %341 = vmatprep.subr.mxu0 0.0
  %342 = vmatpush1.msra.mxu0 0.0
  %343 = vmatprep.subr.mxu0 0.0
  %344 = vmatpush1.msra.mxu0 0.0
  %345 = vmatprep.subr.mxu0 0.0
  %346 = vmatpush1.msra.mxu0 0.0
  %347 = vmatprep.subr.mxu0 0.0
  %348 = vmatpush1.msra.mxu0 0.0
  %349 = vmatprep.subr.mxu0 0.0
  %350 = vmatpush1.msra.mxu0 0.0
  %351 = vmatprep.subr.mxu0 0.0
  %352 = vmatpush1.msra.mxu0 0.0
  %353 = vmatprep.subr.mxu0 0.0
  %354 = vmatpush1.msra.mxu0 0.0
  %355 = vmatprep.subr.mxu0 0.0
  %356 = vmatpush1.msra.mxu0 0.0
  %357 = vmatprep.subr.mxu0 0.0
  %358 = vmatpush1.msra.mxu0 0.0
  %359 = vmatprep.subr.mxu0 0.0
  %360 = vmatpush1.msra.mxu0 0.0
  %361 = vmatprep.subr.mxu0 0.0
  %362 = vmatpush1.msra.mxu0 0.0
  %363 = vmatprep.subr.mxu0 0.0
  %364 = vmatpush1.msra.mxu0 0.0
  %365 = vmatprep.subr.mxu0 0.0
  %366 = vmatpush1.msra.mxu0 0.0
  %367 = vmatprep.subr.mxu0 0.0
  %368 = vmatpush1.msra.mxu0 0.0
  %369 = vmatprep.subr.mxu0 0.0
  %370 = vmatpush1.msra.mxu0 0.0
  %371 = vmatprep.subr.mxu0 0.0
  %372 = vmatpush1.msra.mxu0 0.0
  %373 = vmatprep.subr.mxu0 0.0
  %374 = vmatpush1.msra.mxu0 0.0
  %375 = vmatprep.subr.mxu0 0.0
  %376 = vmatpush1.msra.mxu0 0.0
  %377 = vmatprep.subr.mxu0 0.0
  %378 = vmatpush1.msra.mxu0 0.0
  %379 = vmatprep.subr.mxu0 0.0
  %380 = vmatpush1.msra.mxu0 0.0
  %381 = vmatprep.subr.mxu0 0.0
  %382 = vmatpush1.msra.mxu0 0.0
  %383 = vmatprep.subr.mxu0 0.0
  %384 = vmatpush1.msra.mxu0 0.0
  %385 = vmatprep.subr.mxu0 0.0
  %386 = vmatpush1.msra.mxu0 0.0
  %387 = vmatprep.subr.mxu0 0.0
  %388 = vmatpush1.msra.mxu0 0.0
  %389 = vmatprep.subr.mxu0 0.0
  %390 = vmatpush1.msra.mxu0 0.0
  %391 = vmatprep.subr.mxu0 0.0
  %392 = vmatpush1.msra.mxu0 0.0
  %393 = vmatprep.subr.mxu0 0.0
  %394 = vmatpush1.msra.mxu0 0.0
  %395 = vmatprep.subr.mxu0 0.0
  %396 = vmatpush1.msra.mxu0 0.0
  %397 = vmatprep.subr.mxu0 0.0
  %398 = vmatpush1.msra.mxu0 0.0
  %399 = vmatprep.subr.mxu0 0.0
  %400 = vmatpush1.msra.mxu0 0.0
  %401 = vmatprep.mubr.f32.mxu0 0.0
  %402 = vmatmul.mubr.f32.gmra.mrb[0].mxu0 %v335
  %v403 = vpop.f32.mrb[0].mxu0
  %v404 = vadd.f32 0.0, %v403
  %v405 = vpop.f32.mrb[0].mxu0
  %406 = vdwg.mxu0
  %v407 = vmul.f32 %v404, %v404
  %409 = vrot.lane.b32.xlu0 %v407, 2
  %v410 = vpop.permute.xlu0 %409
  %v412 = vsub.f32 %v404, %v410
  %vm413 = vcmask 15360
  %v414 = vsel %vm413, %v404, %v412
  %415 = vst.msk [vmem:[%s8] sm:$0xff] %vm38, %v414
  // Predicated region
  $region34: #{tpu_custom_call.1} parent=0 // pred_check
    _
  $region35: #{tpu_custom_call.1} parent=0 // pred_check_branch
    %417 = sbr.rel (0) target = $region37
  $region36: #{tpu_custom_call.1} parent=0 // pred_region
    _
  $region37: #{tpu_custom_call.1} parent=0 // pred_fallthru
    _
  // Predicated region
  $region38: #{tpu_custom_call.1} parent=0 // pred_check
    _
  $region39: #{tpu_custom_call.1} parent=0 // pred_check_branch
    %419 = sbr.rel (0) target = $region41
  $region40: #{tpu_custom_call.1} parent=0 // pred_region
    _
  $region41: #{tpu_custom_call.1} parent=0 // pred_fallthru
    _

</llo_original>
